<compile_context>
chip_gen: v7x
topology: tpu7x:2x2x1
jax: 0.10.0
libtpu: 0.0.40
codegen_flags: <defaults>
</compile_context>

<pallas_src>
import jax
import jax.numpy as jnp
from jax.experimental import pallas as pl
from jax.experimental.pallas import tpu as pltpu


def _mlp_kernel(x_ref, w1_ref, b1_ref, w2_ref, b2_ref, w3_ref, b3_ref, o_ref):
    # x_ref: (features, S, 128) f32 in VMEM — batch tile dense on sublanes+lanes.
    # w*/b*: tiny f32 tensors in SMEM, read as scalars.
    # o_ref: (out_dim, S, 128) f32 in VMEM.
    features = x_ref.shape[0]
    n1 = w1_ref.shape[1]
    n2 = w2_ref.shape[1]
    n3 = w3_ref.shape[1]

    # Each row is a dense (S, 128) tile — full vreg occupancy on the VPU.
    rows = [x_ref[k] for k in range(features)]

    def dense(in_rows, w_ref, b_ref, n_out, act):
        # out[n] = act(sum_k in_rows[k] * w[k, n] + b[n])
        # Statically unrolled scalar-broadcast MACs (shapes 5x5/5x3/3x1 are far
        # too small to be worth driving the MXU on v5e/v6e).
        outs = []
        for n in range(n_out):
            acc = in_rows[0] * w_ref[0, n]
            for k in range(1, len(in_rows)):
                acc = acc + in_rows[k] * w_ref[k, n]
            outs.append(act(acc + b_ref[n]))
        return outs

    relu = lambda v: jnp.maximum(v, 0.0)
    h1 = dense(rows, w1_ref, b1_ref, n1, relu)
    h2 = dense(h1, w2_ref, b2_ref, n2, relu)
    out = dense(h2, w3_ref, b3_ref, n3, jax.nn.sigmoid)

    for n in range(n3):
        o_ref[n] = out[n]


def _round_up(x, m):
    return ((x + m - 1) // m) * m


# Tile quantum: 8 sublanes x 128 lanes, so every batch tile is vreg-dense.
_TQ = 8 * 128


def classifier_forward_feature_major(x_fm, params, *, block_batch=262144):
    """Fast path: x_fm is feature-major (features, batch) f32 — no transpose.

    Weights stored (in_features, out_features); biases (out,).
    Returns (out_dim, batch) f32, feature-major.
    """
    features, batch = x_fm.shape
    w1, b1 = params["w1"], params["b1"]
    w2, b2 = params["w2"], params["b2"]
    w3, b3 = params["w3"], params["b3"]
    out_dim = w3.shape[1]

    # --- Tile sizing -------------------------------------------------------
    # Round the user-supplied tile to the (8,128) quantum (robustness), then
    # clamp so the double-buffered input+output working set stays well under
    # every generation's default scoped-VMEM limit (16 MiB on v5e).
    bb = max(_TQ, (int(block_batch) // _TQ) * _TQ)
    vmem_budget = 12 * 1024 * 1024
    bytes_per_lane = 4 * (features + out_dim) * 2        # f32, in+out, 2 buffers
    max_tb = max(_TQ, (vmem_budget // bytes_per_lane) // _TQ * _TQ)
    tb = min(bb, max_tb, _round_up(batch, _TQ))
    assert tb % _TQ == 0
    b_pad = _round_up(batch, tb)
    sub = tb // 128                                       # sublane-block rows/step
    grid = (b_pad // tb,)

    # --- Layout: (features, b_pad//128, 128); pad only when needed,
    # the contiguous split of the last dim is free. ------------------------
    xt = x_fm.astype(jnp.float32)
    if b_pad != batch:
        xt = jnp.pad(xt, ((0, 0), (0, b_pad - batch)))
    xt = xt.reshape(features, b_pad // 128, 128)

    smem = pl.BlockSpec(memory_space=pltpu.MemorySpace.SMEM)

    cost = pl.CostEstimate(
        flops=2 * (features * 5 + 5 * 3 + 3 * 1) * b_pad,
        transcendentals=b_pad,                            # sigmoid exp on EUP
        bytes_accessed=4 * (features + out_dim) * b_pad,
    )

    out_t = pl.pallas_call(
        _mlp_kernel,
        out_shape=jax.ShapeDtypeStruct((out_dim, b_pad // 128, 128), jnp.float32),
        grid=grid,
        in_specs=[
            pl.BlockSpec((features, sub, 128), lambda i: (0, i, 0)),  # streamed x
            smem, smem, smem, smem, smem, smem,                       # tiny params
        ],
        out_specs=pl.BlockSpec((out_dim, sub, 128), lambda i: (0, i, 0)),
        compiler_params=pltpu.CompilerParams(
            dimension_semantics=("parallel",),
            vmem_limit_bytes=32 * 1024 * 1024,
        ),
        cost_estimate=cost,
    )(xt, w1, b1, w2, b2, w3, b3)

    return out_t.reshape(out_dim, b_pad)[:, :batch]


def classifier_forward(x, params, *, block_batch=262144):
    """PyTorch-style entry point: x is (batch, features) f32.

    Pays exactly one fused cast+transpose copy to reach the feature-major
    layout the kernel streams; returns (batch, 1) f32.
    """
    out_fm = classifier_forward_feature_major(
        x.astype(jnp.float32).T, params, block_batch=block_batch)
    return out_fm.T


def init_params(key, features):
    """Deterministic init mimicking PyTorch nn.Linear (uniform ±1/sqrt(fan_in)).

    Weights stored as (in_features, out_features); biases as (out,)."""
    def linear(key, fan_in, fan_out):
        kw, kb = jax.random.split(key)
        bound = 1.0 / jnp.sqrt(jnp.float32(fan_in))
        w = jax.random.uniform(kw, (fan_in, fan_out), jnp.float32, -bound, bound)
        b = jax.random.uniform(kb, (fan_out,), jnp.float32, -bound, bound)
        return w, b

    k1, k2, k3 = jax.random.split(key, 3)
    w1, b1 = linear(k1, features, 5)
    w2, b2 = linear(k2, 5, 3)
    w3, b3 = linear(k3, 3, 1)
    return {"w1": w1, "b1": b1, "w2": w2, "b2": b2, "w3": w3, "b3": b3}


def _reference_forward(x, p):
    h1 = jnp.maximum(x @ p["w1"] + p["b1"], 0.0)
    h2 = jnp.maximum(h1 @ p["w2"] + p["b2"], 0.0)
    return jax.nn.sigmoid(h2 @ p["w3"] + p["b3"])


if __name__ == "__main__":
    # The dataframe selects 5 feature columns: map, used_time, last_time,
    # last_num, isNow  ->  features = 5.
    key = jax.random.PRNGKey(0)
    k_x, k_p, k_x2 = jax.random.split(key, 3)

    batch, features = 8, 5
    x = jax.random.normal(k_x, (batch, features), jnp.float32)
    params = init_params(k_p, features)

    fwd = jax.jit(classifier_forward, static_argnames=("block_batch",))

    out = jax.block_until_ready(fwd(x, params))
    ref = _reference_forward(x, params)
    assert out.shape == (batch, 1)
    assert jnp.allclose(out, ref, atol=1e-5, rtol=1e-5)

    # Exercise the multi-step grid + batch-padding path:
    # batch=3000 with 1024-lane tiles -> 3 grid steps, 72 padded rows.
    batch2 = 3000
    x2 = jax.random.normal(k_x2, (batch2, features), jnp.float32)
    out2 = jax.block_until_ready(fwd(x2, params, block_batch=1024))
    ref2 = _reference_forward(x2, params)
    assert out2.shape == (batch2, 1)
    assert jnp.allclose(out2, ref2, atol=1e-5, rtol=1e-5)

    # Feature-major fast path (no wrapper transpose at all).
    out3 = jax.block_until_ready(
        jax.jit(classifier_forward_feature_major)(x2.T, params))
    assert out3.shape == (1, batch2)
    assert jnp.allclose(out3.T, ref2, atol=1e-5, rtol=1e-5)

    print("KERNEL_OK")
</pallas_src>

<mosaic_0001>
module attributes {stable_mosaic.version = 11 : i64} {
  func.func @_mlp_kernel(%arg0: i32, %arg1: memref<5x8x128xf32, #tpu.memory_space<vmem>>, %arg2: memref<5x5xf32, #tpu.memory_space<smem>>, %arg3: memref<5xf32, #tpu.memory_space<smem>>, %arg4: memref<5x3xf32, #tpu.memory_space<smem>>, %arg5: memref<3xf32, #tpu.memory_space<smem>>, %arg6: memref<3x1xf32, #tpu.memory_space<smem>>, %arg7: memref<1xf32, #tpu.memory_space<smem>>, %arg8: memref<1x8x128xf32, #tpu.memory_space<vmem>>) attributes {dimension_semantics = [#tpu.dimension_semantics<parallel>], iteration_bounds = array<i64: 1>, scalar_prefetch = 0 : i64, scratch_operands = 0 : i64, tpu.core_type = #tpu.core_type<tc>, window_params = [{transform_indices = @transform_0, window_bounds = array<i64: 5, 8, 128>}, {transform_indices = @transform_1, window_bounds = array<i64: 5, 5>}, {transform_indices = @transform_2, window_bounds = array<i64: 5>}, {transform_indices = @transform_3, window_bounds = array<i64: 5, 3>}, {transform_indices = @transform_4, window_bounds = array<i64: 3>}, {transform_indices = @transform_5, window_bounds = array<i64: 3, 1>}, {transform_indices = @transform_6, window_bounds = array<i64: 1>}, {transform_indices = @transform_7, window_bounds = array<i64: 1, 8, 128>}]} {
    %c0 = arith.constant 0 : index
    %c0_0 = arith.constant 0 : index
    %c0_1 = arith.constant 0 : index
    %0 = vector.load %arg1[%c0, %c0_0, %c0_1] : memref<5x8x128xf32, #tpu.memory_space<vmem>>, vector<1x8x128xf32>
    %1 = vector.shape_cast %0 : vector<1x8x128xf32> to vector<8x128xf32>
    %c1 = arith.constant 1 : index
    %c0_2 = arith.constant 0 : index
    %c0_3 = arith.constant 0 : index
    %2 = vector.load %arg1[%c1, %c0_2, %c0_3] : memref<5x8x128xf32, #tpu.memory_space<vmem>>, vector<1x8x128xf32>
    %3 = vector.shape_cast %2 : vector<1x8x128xf32> to vector<8x128xf32>
    %c2 = arith.constant 2 : index
    %c0_4 = arith.constant 0 : index
    %c0_5 = arith.constant 0 : index
    %4 = vector.load %arg1[%c2, %c0_4, %c0_5] : memref<5x8x128xf32, #tpu.memory_space<vmem>>, vector<1x8x128xf32>
    %5 = vector.shape_cast %4 : vector<1x8x128xf32> to vector<8x128xf32>
    %c3 = arith.constant 3 : index
    %c0_6 = arith.constant 0 : index
    %c0_7 = arith.constant 0 : index
    %6 = vector.load %arg1[%c3, %c0_6, %c0_7] : memref<5x8x128xf32, #tpu.memory_space<vmem>>, vector<1x8x128xf32>
    %7 = vector.shape_cast %6 : vector<1x8x128xf32> to vector<8x128xf32>
    %c4 = arith.constant 4 : index
    %c0_8 = arith.constant 0 : index
    %c0_9 = arith.constant 0 : index
    %8 = vector.load %arg1[%c4, %c0_8, %c0_9] : memref<5x8x128xf32, #tpu.memory_space<vmem>>, vector<1x8x128xf32>
    %9 = vector.shape_cast %8 : vector<1x8x128xf32> to vector<8x128xf32>
    %c0_10 = arith.constant 0 : index
    %c0_11 = arith.constant 0 : index
    %10 = memref.load %arg2[%c0_10, %c0_11] : memref<5x5xf32, #tpu.memory_space<smem>>
    %11 = vector.broadcast %10 : f32 to vector<8x128xf32>
    %12 = arith.mulf %1, %11 : vector<8x128xf32>
    %c1_12 = arith.constant 1 : index
    %c0_13 = arith.constant 0 : index
    %13 = memref.load %arg2[%c1_12, %c0_13] : memref<5x5xf32, #tpu.memory_space<smem>>
    %14 = vector.broadcast %13 : f32 to vector<8x128xf32>
    %15 = arith.mulf %3, %14 : vector<8x128xf32>
    %16 = arith.addf %12, %15 : vector<8x128xf32>
    %c2_14 = arith.constant 2 : index
    %c0_15 = arith.constant 0 : index
    %17 = memref.load %arg2[%c2_14, %c0_15] : memref<5x5xf32, #tpu.memory_space<smem>>
    %18 = vector.broadcast %17 : f32 to vector<8x128xf32>
    %19 = arith.mulf %5, %18 : vector<8x128xf32>
    %20 = arith.addf %16, %19 : vector<8x128xf32>
    %c3_16 = arith.constant 3 : index
    %c0_17 = arith.constant 0 : index
    %21 = memref.load %arg2[%c3_16, %c0_17] : memref<5x5xf32, #tpu.memory_space<smem>>
    %22 = vector.broadcast %21 : f32 to vector<8x128xf32>
    %23 = arith.mulf %7, %22 : vector<8x128xf32>
    %24 = arith.addf %20, %23 : vector<8x128xf32>
    %c4_18 = arith.constant 4 : index
    %c0_19 = arith.constant 0 : index
    %25 = memref.load %arg2[%c4_18, %c0_19] : memref<5x5xf32, #tpu.memory_space<smem>>
    %26 = vector.broadcast %25 : f32 to vector<8x128xf32>
    %27 = arith.mulf %9, %26 : vector<8x128xf32>
    %28 = arith.addf %24, %27 : vector<8x128xf32>
    %c0_20 = arith.constant 0 : index
    %29 = memref.load %arg3[%c0_20] : memref<5xf32, #tpu.memory_space<smem>>
    %30 = vector.broadcast %29 : f32 to vector<8x128xf32>
    %31 = arith.addf %28, %30 : vector<8x128xf32>
    %cst = arith.constant 0.000000e+00 : f32
    %32 = vector.broadcast %cst : f32 to vector<8x128xf32>
    %33 = arith.maximumf %31, %32 : vector<8x128xf32>
    %c0_21 = arith.constant 0 : index
    %c1_22 = arith.constant 1 : index
    %34 = memref.load %arg2[%c0_21, %c1_22] : memref<5x5xf32, #tpu.memory_space<smem>>
    %35 = vector.broadcast %34 : f32 to vector<8x128xf32>
    %36 = arith.mulf %1, %35 : vector<8x128xf32>
    %c1_23 = arith.constant 1 : index
    %c1_24 = arith.constant 1 : index
    %37 = memref.load %arg2[%c1_23, %c1_24] : memref<5x5xf32, #tpu.memory_space<smem>>
    %38 = vector.broadcast %37 : f32 to vector<8x128xf32>
    %39 = arith.mulf %3, %38 : vector<8x128xf32>
    %40 = arith.addf %36, %39 : vector<8x128xf32>
    %c2_25 = arith.constant 2 : index
    %c1_26 = arith.constant 1 : index
    %41 = memref.load %arg2[%c2_25, %c1_26] : memref<5x5xf32, #tpu.memory_space<smem>>
    %42 = vector.broadcast %41 : f32 to vector<8x128xf32>
    %43 = arith.mulf %5, %42 : vector<8x128xf32>
    %44 = arith.addf %40, %43 : vector<8x128xf32>
    %c3_27 = arith.constant 3 : index
    %c1_28 = arith.constant 1 : index
    %45 = memref.load %arg2[%c3_27, %c1_28] : memref<5x5xf32, #tpu.memory_space<smem>>
    %46 = vector.broadcast %45 : f32 to vector<8x128xf32>
    %47 = arith.mulf %7, %46 : vector<8x128xf32>
    %48 = arith.addf %44, %47 : vector<8x128xf32>
    %c4_29 = arith.constant 4 : index
    %c1_30 = arith.constant 1 : index
    %49 = memref.load %arg2[%c4_29, %c1_30] : memref<5x5xf32, #tpu.memory_space<smem>>
    %50 = vector.broadcast %49 : f32 to vector<8x128xf32>
    %51 = arith.mulf %9, %50 : vector<8x128xf32>
    %52 = arith.addf %48, %51 : vector<8x128xf32>
    %c1_31 = arith.constant 1 : index
    %53 = memref.load %arg3[%c1_31] : memref<5xf32, #tpu.memory_space<smem>>
    %54 = vector.broadcast %53 : f32 to vector<8x128xf32>
    %55 = arith.addf %52, %54 : vector<8x128xf32>
    %cst_32 = arith.constant 0.000000e+00 : f32
    %56 = vector.broadcast %cst_32 : f32 to vector<8x128xf32>
    %57 = arith.maximumf %55, %56 : vector<8x128xf32>
    %c0_33 = arith.constant 0 : index
    %c2_34 = arith.constant 2 : index
    %58 = memref.load %arg2[%c0_33, %c2_34] : memref<5x5xf32, #tpu.memory_space<smem>>
    %59 = vector.broadcast %58 : f32 to vector<8x128xf32>
    %60 = arith.mulf %1, %59 : vector<8x128xf32>
    %c1_35 = arith.constant 1 : index
    %c2_36 = arith.constant 2 : index
    %61 = memref.load %arg2[%c1_35, %c2_36] : memref<5x5xf32, #tpu.memory_space<smem>>
    %62 = vector.broadcast %61 : f32 to vector<8x128xf32>
    %63 = arith.mulf %3, %62 : vector<8x128xf32>
    %64 = arith.addf %60, %63 : vector<8x128xf32>
    %c2_37 = arith.constant 2 : index
    %c2_38 = arith.constant 2 : index
    %65 = memref.load %arg2[%c2_37, %c2_38] : memref<5x5xf32, #tpu.memory_space<smem>>
    %66 = vector.broadcast %65 : f32 to vector<8x128xf32>
    %67 = arith.mulf %5, %66 : vector<8x128xf32>
    %68 = arith.addf %64, %67 : vector<8x128xf32>
    %c3_39 = arith.constant 3 : index
    %c2_40 = arith.constant 2 : index
    %69 = memref.load %arg2[%c3_39, %c2_40] : memref<5x5xf32, #tpu.memory_space<smem>>
    %70 = vector.broadcast %69 : f32 to vector<8x128xf32>
    %71 = arith.mulf %7, %70 : vector<8x128xf32>
    %72 = arith.addf %68, %71 : vector<8x128xf32>
    %c4_41 = arith.constant 4 : index
    %c2_42 = arith.constant 2 : index
    %73 = memref.load %arg2[%c4_41, %c2_42] : memref<5x5xf32, #tpu.memory_space<smem>>
    %74 = vector.broadcast %73 : f32 to vector<8x128xf32>
    %75 = arith.mulf %9, %74 : vector<8x128xf32>
    %76 = arith.addf %72, %75 : vector<8x128xf32>
    %c2_43 = arith.constant 2 : index
    %77 = memref.load %arg3[%c2_43] : memref<5xf32, #tpu.memory_space<smem>>
    %78 = vector.broadcast %77 : f32 to vector<8x128xf32>
    %79 = arith.addf %76, %78 : vector<8x128xf32>
    %cst_44 = arith.constant 0.000000e+00 : f32
    %80 = vector.broadcast %cst_44 : f32 to vector<8x128xf32>
    %81 = arith.maximumf %79, %80 : vector<8x128xf32>
    %c0_45 = arith.constant 0 : index
    %c3_46 = arith.constant 3 : index
    %82 = memref.load %arg2[%c0_45, %c3_46] : memref<5x5xf32, #tpu.memory_space<smem>>
    %83 = vector.broadcast %82 : f32 to vector<8x128xf32>
    %84 = arith.mulf %1, %83 : vector<8x128xf32>
    %c1_47 = arith.constant 1 : index
    %c3_48 = arith.constant 3 : index
    %85 = memref.load %arg2[%c1_47, %c3_48] : memref<5x5xf32, #tpu.memory_space<smem>>
    %86 = vector.broadcast %85 : f32 to vector<8x128xf32>
    %87 = arith.mulf %3, %86 : vector<8x128xf32>
    %88 = arith.addf %84, %87 : vector<8x128xf32>
    %c2_49 = arith.constant 2 : index
    %c3_50 = arith.constant 3 : index
    %89 = memref.load %arg2[%c2_49, %c3_50] : memref<5x5xf32, #tpu.memory_space<smem>>
    %90 = vector.broadcast %89 : f32 to vector<8x128xf32>
    %91 = arith.mulf %5, %90 : vector<8x128xf32>
    %92 = arith.addf %88, %91 : vector<8x128xf32>
    %c3_51 = arith.constant 3 : index
    %c3_52 = arith.constant 3 : index
    %93 = memref.load %arg2[%c3_51, %c3_52] : memref<5x5xf32, #tpu.memory_space<smem>>
    %94 = vector.broadcast %93 : f32 to vector<8x128xf32>
    %95 = arith.mulf %7, %94 : vector<8x128xf32>
    %96 = arith.addf %92, %95 : vector<8x128xf32>
    %c4_53 = arith.constant 4 : index
    %c3_54 = arith.constant 3 : index
    %97 = memref.load %arg2[%c4_53, %c3_54] : memref<5x5xf32, #tpu.memory_space<smem>>
    %98 = vector.broadcast %97 : f32 to vector<8x128xf32>
    %99 = arith.mulf %9, %98 : vector<8x128xf32>
    %100 = arith.addf %96, %99 : vector<8x128xf32>
    %c3_55 = arith.constant 3 : index
    %101 = memref.load %arg3[%c3_55] : memref<5xf32, #tpu.memory_space<smem>>
    %102 = vector.broadcast %101 : f32 to vector<8x128xf32>
    %103 = arith.addf %100, %102 : vector<8x128xf32>
    %cst_56 = arith.constant 0.000000e+00 : f32
    %104 = vector.broadcast %cst_56 : f32 to vector<8x128xf32>
    %105 = arith.maximumf %103, %104 : vector<8x128xf32>
    %c0_57 = arith.constant 0 : index
    %c4_58 = arith.constant 4 : index
    %106 = memref.load %arg2[%c0_57, %c4_58] : memref<5x5xf32, #tpu.memory_space<smem>>
    %107 = vector.broadcast %106 : f32 to vector<8x128xf32>
    %108 = arith.mulf %1, %107 : vector<8x128xf32>
    %c1_59 = arith.constant 1 : index
    %c4_60 = arith.constant 4 : index
    %109 = memref.load %arg2[%c1_59, %c4_60] : memref<5x5xf32, #tpu.memory_space<smem>>
    %110 = vector.broadcast %109 : f32 to vector<8x128xf32>
    %111 = arith.mulf %3, %110 : vector<8x128xf32>
    %112 = arith.addf %108, %111 : vector<8x128xf32>
    %c2_61 = arith.constant 2 : index
    %c4_62 = arith.constant 4 : index
    %113 = memref.load %arg2[%c2_61, %c4_62] : memref<5x5xf32, #tpu.memory_space<smem>>
    %114 = vector.broadcast %113 : f32 to vector<8x128xf32>
    %115 = arith.mulf %5, %114 : vector<8x128xf32>
    %116 = arith.addf %112, %115 : vector<8x128xf32>
    %c3_63 = arith.constant 3 : index
    %c4_64 = arith.constant 4 : index
    %117 = memref.load %arg2[%c3_63, %c4_64] : memref<5x5xf32, #tpu.memory_space<smem>>
    %118 = vector.broadcast %117 : f32 to vector<8x128xf32>
    %119 = arith.mulf %7, %118 : vector<8x128xf32>
    %120 = arith.addf %116, %119 : vector<8x128xf32>
    %c4_65 = arith.constant 4 : index
    %c4_66 = arith.constant 4 : index
    %121 = memref.load %arg2[%c4_65, %c4_66] : memref<5x5xf32, #tpu.memory_space<smem>>
    %122 = vector.broadcast %121 : f32 to vector<8x128xf32>
    %123 = arith.mulf %9, %122 : vector<8x128xf32>
    %124 = arith.addf %120, %123 : vector<8x128xf32>
    %c4_67 = arith.constant 4 : index
    %125 = memref.load %arg3[%c4_67] : memref<5xf32, #tpu.memory_space<smem>>
    %126 = vector.broadcast %125 : f32 to vector<8x128xf32>
    %127 = arith.addf %124, %126 : vector<8x128xf32>
    %cst_68 = arith.constant 0.000000e+00 : f32
    %128 = vector.broadcast %cst_68 : f32 to vector<8x128xf32>
    %129 = arith.maximumf %127, %128 : vector<8x128xf32>
    %c0_69 = arith.constant 0 : index
    %c0_70 = arith.constant 0 : index
    %130 = memref.load %arg4[%c0_69, %c0_70] : memref<5x3xf32, #tpu.memory_space<smem>>
    %131 = vector.broadcast %130 : f32 to vector<8x128xf32>
    %132 = arith.mulf %33, %131 : vector<8x128xf32>
    %c1_71 = arith.constant 1 : index
    %c0_72 = arith.constant 0 : index
    %133 = memref.load %arg4[%c1_71, %c0_72] : memref<5x3xf32, #tpu.memory_space<smem>>
    %134 = vector.broadcast %133 : f32 to vector<8x128xf32>
    %135 = arith.mulf %57, %134 : vector<8x128xf32>
    %136 = arith.addf %132, %135 : vector<8x128xf32>
    %c2_73 = arith.constant 2 : index
    %c0_74 = arith.constant 0 : index
    %137 = memref.load %arg4[%c2_73, %c0_74] : memref<5x3xf32, #tpu.memory_space<smem>>
    %138 = vector.broadcast %137 : f32 to vector<8x128xf32>
    %139 = arith.mulf %81, %138 : vector<8x128xf32>
    %140 = arith.addf %136, %139 : vector<8x128xf32>
    %c3_75 = arith.constant 3 : index
    %c0_76 = arith.constant 0 : index
    %141 = memref.load %arg4[%c3_75, %c0_76] : memref<5x3xf32, #tpu.memory_space<smem>>
    %142 = vector.broadcast %141 : f32 to vector<8x128xf32>
    %143 = arith.mulf %105, %142 : vector<8x128xf32>
    %144 = arith.addf %140, %143 : vector<8x128xf32>
    %c4_77 = arith.constant 4 : index
    %c0_78 = arith.constant 0 : index
    %145 = memref.load %arg4[%c4_77, %c0_78] : memref<5x3xf32, #tpu.memory_space<smem>>
    %146 = vector.broadcast %145 : f32 to vector<8x128xf32>
    %147 = arith.mulf %129, %146 : vector<8x128xf32>
    %148 = arith.addf %144, %147 : vector<8x128xf32>
    %c0_79 = arith.constant 0 : index
    %149 = memref.load %arg5[%c0_79] : memref<3xf32, #tpu.memory_space<smem>>
    %150 = vector.broadcast %149 : f32 to vector<8x128xf32>
    %151 = arith.addf %148, %150 : vector<8x128xf32>
    %cst_80 = arith.constant 0.000000e+00 : f32
    %152 = vector.broadcast %cst_80 : f32 to vector<8x128xf32>
    %153 = arith.maximumf %151, %152 : vector<8x128xf32>
    %c0_81 = arith.constant 0 : index
    %c1_82 = arith.constant 1 : index
    %154 = memref.load %arg4[%c0_81, %c1_82] : memref<5x3xf32, #tpu.memory_space<smem>>
    %155 = vector.broadcast %154 : f32 to vector<8x128xf32>
    %156 = arith.mulf %33, %155 : vector<8x128xf32>
    %c1_83 = arith.constant 1 : index
    %c1_84 = arith.constant 1 : index
    %157 = memref.load %arg4[%c1_83, %c1_84] : memref<5x3xf32, #tpu.memory_space<smem>>
    %158 = vector.broadcast %157 : f32 to vector<8x128xf32>
    %159 = arith.mulf %57, %158 : vector<8x128xf32>
    %160 = arith.addf %156, %159 : vector<8x128xf32>
    %c2_85 = arith.constant 2 : index
    %c1_86 = arith.constant 1 : index
    %161 = memref.load %arg4[%c2_85, %c1_86] : memref<5x3xf32, #tpu.memory_space<smem>>
    %162 = vector.broadcast %161 : f32 to vector<8x128xf32>
    %163 = arith.mulf %81, %162 : vector<8x128xf32>
    %164 = arith.addf %160, %163 : vector<8x128xf32>
    %c3_87 = arith.constant 3 : index
    %c1_88 = arith.constant 1 : index
    %165 = memref.load %arg4[%c3_87, %c1_88] : memref<5x3xf32, #tpu.memory_space<smem>>
    %166 = vector.broadcast %165 : f32 to vector<8x128xf32>
    %167 = arith.mulf %105, %166 : vector<8x128xf32>
    %168 = arith.addf %164, %167 : vector<8x128xf32>
    %c4_89 = arith.constant 4 : index
    %c1_90 = arith.constant 1 : index
    %169 = memref.load %arg4[%c4_89, %c1_90] : memref<5x3xf32, #tpu.memory_space<smem>>
    %170 = vector.broadcast %169 : f32 to vector<8x128xf32>
    %171 = arith.mulf %129, %170 : vector<8x128xf32>
    %172 = arith.addf %168, %171 : vector<8x128xf32>
    %c1_91 = arith.constant 1 : index
    %173 = memref.load %arg5[%c1_91] : memref<3xf32, #tpu.memory_space<smem>>
    %174 = vector.broadcast %173 : f32 to vector<8x128xf32>
    %175 = arith.addf %172, %174 : vector<8x128xf32>
    %cst_92 = arith.constant 0.000000e+00 : f32
    %176 = vector.broadcast %cst_92 : f32 to vector<8x128xf32>
    %177 = arith.maximumf %175, %176 : vector<8x128xf32>
    %c0_93 = arith.constant 0 : index
    %c2_94 = arith.constant 2 : index
    %178 = memref.load %arg4[%c0_93, %c2_94] : memref<5x3xf32, #tpu.memory_space<smem>>
    %179 = vector.broadcast %178 : f32 to vector<8x128xf32>
    %180 = arith.mulf %33, %179 : vector<8x128xf32>
    %c1_95 = arith.constant 1 : index
    %c2_96 = arith.constant 2 : index
    %181 = memref.load %arg4[%c1_95, %c2_96] : memref<5x3xf32, #tpu.memory_space<smem>>
    %182 = vector.broadcast %181 : f32 to vector<8x128xf32>
    %183 = arith.mulf %57, %182 : vector<8x128xf32>
    %184 = arith.addf %180, %183 : vector<8x128xf32>
    %c2_97 = arith.constant 2 : index
    %c2_98 = arith.constant 2 : index
    %185 = memref.load %arg4[%c2_97, %c2_98] : memref<5x3xf32, #tpu.memory_space<smem>>
    %186 = vector.broadcast %185 : f32 to vector<8x128xf32>
    %187 = arith.mulf %81, %186 : vector<8x128xf32>
    %188 = arith.addf %184, %187 : vector<8x128xf32>
    %c3_99 = arith.constant 3 : index
    %c2_100 = arith.constant 2 : index
    %189 = memref.load %arg4[%c3_99, %c2_100] : memref<5x3xf32, #tpu.memory_space<smem>>
    %190 = vector.broadcast %189 : f32 to vector<8x128xf32>
    %191 = arith.mulf %105, %190 : vector<8x128xf32>
    %192 = arith.addf %188, %191 : vector<8x128xf32>
    %c4_101 = arith.constant 4 : index
    %c2_102 = arith.constant 2 : index
    %193 = memref.load %arg4[%c4_101, %c2_102] : memref<5x3xf32, #tpu.memory_space<smem>>
    %194 = vector.broadcast %193 : f32 to vector<8x128xf32>
    %195 = arith.mulf %129, %194 : vector<8x128xf32>
    %196 = arith.addf %192, %195 : vector<8x128xf32>
    %c2_103 = arith.constant 2 : index
    %197 = memref.load %arg5[%c2_103] : memref<3xf32, #tpu.memory_space<smem>>
    %198 = vector.broadcast %197 : f32 to vector<8x128xf32>
    %199 = arith.addf %196, %198 : vector<8x128xf32>
    %cst_104 = arith.constant 0.000000e+00 : f32
    %200 = vector.broadcast %cst_104 : f32 to vector<8x128xf32>
    %201 = arith.maximumf %199, %200 : vector<8x128xf32>
    %c0_105 = arith.constant 0 : index
    %c0_106 = arith.constant 0 : index
    %202 = memref.load %arg6[%c0_105, %c0_106] : memref<3x1xf32, #tpu.memory_space<smem>>
    %203 = vector.broadcast %202 : f32 to vector<8x128xf32>
    %204 = arith.mulf %153, %203 : vector<8x128xf32>
    %c1_107 = arith.constant 1 : index
    %c0_108 = arith.constant 0 : index
    %205 = memref.load %arg6[%c1_107, %c0_108] : memref<3x1xf32, #tpu.memory_space<smem>>
    %206 = vector.broadcast %205 : f32 to vector<8x128xf32>
    %207 = arith.mulf %177, %206 : vector<8x128xf32>
    %208 = arith.addf %204, %207 : vector<8x128xf32>
    %c2_109 = arith.constant 2 : index
    %c0_110 = arith.constant 0 : index
    %209 = memref.load %arg6[%c2_109, %c0_110] : memref<3x1xf32, #tpu.memory_space<smem>>
    %210 = vector.broadcast %209 : f32 to vector<8x128xf32>
    %211 = arith.mulf %201, %210 : vector<8x128xf32>
    %212 = arith.addf %208, %211 : vector<8x128xf32>
    %c0_111 = arith.constant 0 : index
    %213 = memref.load %arg7[%c0_111] : memref<1xf32, #tpu.memory_space<smem>>
    %214 = vector.broadcast %213 : f32 to vector<8x128xf32>
    %215 = arith.addf %212, %214 : vector<8x128xf32>
    %216 = arith.negf %215 : vector<8x128xf32>
    %217 = math.exp %216 : vector<8x128xf32>
    %cst_112 = arith.constant 1.000000e+00 : f32
    %218 = vector.broadcast %cst_112 : f32 to vector<8x128xf32>
    %219 = arith.addf %218, %217 : vector<8x128xf32>
    %220 = arith.divf %218, %219 : vector<8x128xf32>
    %c0_113 = arith.constant 0 : index
    %c0_114 = arith.constant 0 : index
    %c0_115 = arith.constant 0 : index
    %221 = vector.load %arg8[%c0_113, %c0_114, %c0_115] : memref<1x8x128xf32, #tpu.memory_space<vmem>>, vector<1x8x128xf32>
    %222 = vector.shape_cast %221 : vector<1x8x128xf32> to vector<8x128xf32>
    %223 = vector.shape_cast %220 : vector<8x128xf32> to vector<1x8x128xf32>
    tpu.vector_store %arg8[%c0_113, %c0_114, %c0_115], %223 {strides = array<i32>} : memref<1x8x128xf32, #tpu.memory_space<vmem>>, vector<1x8x128xf32>,
    return
  }
  func.func @transform_0(%arg0: i32) -> (i32, i32, i32) {
    %c0_i32 = arith.constant 0 : i32
    %c0_i32_0 = arith.constant 0 : i32
    %c0_i32_1 = arith.constant 0 : i32
    return %c0_i32, %arg0, %c0_i32_0 : i32, i32, i32
  }
  func.func @transform_1(%arg0: i32) -> (i32, i32) {
    %c0_i32 = arith.constant 0 : i32
    %c0_i32_0 = arith.constant 0 : i32
    %c0_i32_1 = arith.constant 0 : i32
    return %c0_i32, %c0_i32_0 : i32, i32
  }
  func.func @transform_2(%arg0: i32) -> i32 {
    %c0_i32 = arith.constant 0 : i32
    %c0_i32_0 = arith.constant 0 : i32
    return %c0_i32 : i32
  }
  func.func @transform_3(%arg0: i32) -> (i32, i32) {
    %c0_i32 = arith.constant 0 : i32
    %c0_i32_0 = arith.constant 0 : i32
    %c0_i32_1 = arith.constant 0 : i32
    return %c0_i32, %c0_i32_0 : i32, i32
  }
  func.func @transform_4(%arg0: i32) -> i32 {
    %c0_i32 = arith.constant 0 : i32
    %c0_i32_0 = arith.constant 0 : i32
    return %c0_i32 : i32
  }
  func.func @transform_5(%arg0: i32) -> (i32, i32) {
    %c0_i32 = arith.constant 0 : i32
    %c0_i32_0 = arith.constant 0 : i32
    %c0_i32_1 = arith.constant 0 : i32
    return %c0_i32, %c0_i32_0 : i32, i32
  }
  func.func @transform_6(%arg0: i32) -> i32 {
    %c0_i32 = arith.constant 0 : i32
    %c0_i32_0 = arith.constant 0 : i32
    return %c0_i32 : i32
  }
  func.func @transform_7(%arg0: i32) -> (i32, i32, i32) {
    %c0_i32 = arith.constant 0 : i32
    %c0_i32_0 = arith.constant 0 : i32
    %c0_i32_1 = arith.constant 0 : i32
    return %c0_i32, %arg0, %c0_i32_0 : i32, i32, i32
  }
}

</mosaic_0001>

<llo_original>
// kernel: classifier_forward.1
$region0: #{classifier_forward.1}
  #allocation0 [shape = 'u32[]', space=smem, size = 0x4, offset = 0x4, fixed_abs, tag = 'smem constant byte address 0x4 - core index']
  #allocation1 [shape = 'u32[144,128]{1,0:T(1,128)}', space=vmem, size = 0x12000, scoped, tag = 'internal scratch']
  #allocation2 [shape = 'f32[1]{0:T(128)S(6)}', space=smem, size = 0x200, scoped, tag = 'scoped memory for classifier_forward.1']
  %s0 = inlined_call_operand.vmem [shape: f32[5,8,128], index: 0, kind: input, shape index: {}]
  %s1 = inlined_call_operand.vmem [shape: f32[5,5], index: 1, kind: input, shape index: {}]
  %s2 = inlined_call_operand.vmem [shape: f32[5], index: 2, kind: input, shape index: {}]
  %s3 = inlined_call_operand.vmem [shape: f32[5,3], index: 3, kind: input, shape index: {}]
  %s4 = inlined_call_operand.vmem [shape: f32[3], index: 4, kind: input, shape index: {}]
  %s5 = inlined_call_operand.vmem [shape: f32[3,1], index: 5, kind: input, shape index: {}]
  %s6 = inlined_call_operand.<no memory space> [shape: f32[1], index: 6, kind: input, shape index: {}]
  %s7 = inlined_call_operand.vmem [shape: f32[1,8,128], index: 7, kind: output, shape index: {}]
  %s8 = sld [smem:[#allocation0]]
  $region58: #{classifier_forward.1} parent=0
    _
  %s10 = ssub.s32 1, %s8
  %s11 = scalar_select 0, %s10, %s8
  %12 = sst [smem:[#allocation2]] %s6
  $region1: #{classifier_forward.1} parent=0
    #allocation3 [shape = 'u8[4096]{0}', space=smem, size = 0x1000, scoped, tag = 'input window, operand 1, single buffered']
    #allocation4 [shape = 's32[1]{0}', space=sflag, size = 0x4, scoped, tag = 'scoped memory for classifier_forward.1']
    #allocation5 [shape = 'u8[512]{0}', space=smem, size = 0x200, scoped, tag = 'input window, operand 2, single buffered']
    #allocation6 [shape = 's32[1]{0}', space=sflag, size = 0x4, scoped, tag = 'scoped memory for classifier_forward.1']
    #allocation7 [shape = 'u8[4096]{0}', space=smem, size = 0x1000, scoped, tag = 'input window, operand 3, single buffered']
    #allocation8 [shape = 'u8[512]{0}', space=smem, size = 0x200, scoped, tag = 'input window, operand 4, single buffered']
    #allocation9 [shape = 's32[1]{0}', space=sflag, size = 0x4, scoped, tag = 'scoped memory for classifier_forward.1']
    #allocation10 [shape = 'u8[2048]{0}', space=smem, size = 0x800, scoped, tag = 'input window, operand 5, single buffered']
    %13 = vsyncpa [#allocation4], 0
    %14 = vsyncpa [#allocation6], 0
    %15 = vsyncpa [#allocation9], 0
    // Predicated region
    $region2: #{classifier_forward.1} parent=1 // pred_check
      _
    $region3: #{classifier_forward.1} parent=1 // pred_check_branch
      %17 = sbr.rel (0) target = $region5
    $region4: #{classifier_forward.1} parent=1 // pred_region
      _
    $region5: #{classifier_forward.1} parent=1 // pred_fallthru
      _
    // Predicated region
    $region6: #{classifier_forward.1} parent=1 // pred_check
      _
    $region7: #{classifier_forward.1} parent=1 // pred_check_branch
      %19 = sbr.rel (0) target = $region9
    $region8: #{classifier_forward.1} parent=1 // pred_region
      %s21 = ssub.s32 128, 128
      %22 = vsyncadd [#allocation4], %s21
      %s24 = sshll.u32 %s1, 4
      %s25 = int_to_ptr.vmem [resolvable:$true] %s24
      %27 = dma.vmem_to_smem %s25, 128, [#allocation3], [#allocation4]
    $region9: #{classifier_forward.1} parent=1 // pred_fallthru
      _
    // Predicated region
    $region10: #{classifier_forward.1} parent=1 // pred_check
      _
    $region11: #{classifier_forward.1} parent=1 // pred_check_branch
      %29 = sbr.rel (0) target = $region13
    $region12: #{classifier_forward.1} parent=1 // pred_region
      %s31 = ssub.s32 16, 16
      %32 = vsyncadd [#allocation6], %s31
      %s34 = sshll.u32 %s2, 4
      %s35 = int_to_ptr.vmem [resolvable:$true] %s34
      %37 = dma.vmem_to_smem %s35, 16, [#allocation5], [#allocation6]
    $region13: #{classifier_forward.1} parent=1 // pred_fallthru
      _
    // Predicated region
    $region14: #{classifier_forward.1} parent=1 // pred_check
      _
    $region15: #{classifier_forward.1} parent=1 // pred_check_branch
      %39 = sbr.rel (0) target = $region17
    $region16: #{classifier_forward.1} parent=1 // pred_region
      %s41 = ssub.s32 128, 128
      %42 = vsyncadd [#allocation6], %s41
      %s44 = sshll.u32 %s3, 4
      %s45 = int_to_ptr.vmem [resolvable:$true] %s44
      %47 = dma.vmem_to_smem %s45, 128, [#allocation7], [#allocation6]
    $region17: #{classifier_forward.1} parent=1 // pred_fallthru
      _
    // Predicated region
    $region18: #{classifier_forward.1} parent=1 // pred_check
      _
    $region19: #{classifier_forward.1} parent=1 // pred_check_branch
      %49 = sbr.rel (0) target = $region21
    $region20: #{classifier_forward.1} parent=1 // pred_region
      %s51 = ssub.s32 16, 16
      %52 = vsyncadd [#allocation9], %s51
      %s54 = sshll.u32 %s4, 4
      %s55 = int_to_ptr.vmem [resolvable:$true] %s54
      %57 = dma.vmem_to_smem %s55, 16, [#allocation8], [#allocation9]
    $region21: #{classifier_forward.1} parent=1 // pred_fallthru
      _
    // Predicated region
    $region22: #{classifier_forward.1} parent=1 // pred_check
      _
    $region23: #{classifier_forward.1} parent=1 // pred_check_branch
      %59 = sbr.rel (0) target = $region25
    $region24: #{classifier_forward.1} parent=1 // pred_region
      %s61 = ssub.s32 64, 64
      %62 = vsyncadd [#allocation9], %s61
      %s64 = sshll.u32 %s5, 4
      %s65 = int_to_ptr.vmem [resolvable:$true] %s64
      %67 = dma.vmem_to_smem %s65, 64, [#allocation10], [#allocation9]
    $region25: #{classifier_forward.1} parent=1 // pred_fallthru
      _
    // Predicated region
    $region26: #{classifier_forward.1} parent=1 // pred_check
      _
    $region27: #{classifier_forward.1} parent=1 // pred_check_branch
      %69 = sbr.rel (0) target = $region29
    $region28: #{classifier_forward.1} parent=1 // pred_region
      _
    $region29: #{classifier_forward.1} parent=1 // pred_fallthru
      _
    // Predicated region
    $region30: #{classifier_forward.1} parent=1 // pred_check
      _
    $region31: #{classifier_forward.1} parent=1 // pred_check_branch
      %71 = sbr.rel (0) target = $region33
    $region32: #{classifier_forward.1} parent=1 // pred_region
      %72 = dma.done [#allocation4], 128
    $region33: #{classifier_forward.1} parent=1 // pred_fallthru
      _
    // Predicated region
    $region34: #{classifier_forward.1} parent=1 // pred_check
      _
    $region35: #{classifier_forward.1} parent=1 // pred_check_branch
      %74 = sbr.rel (0) target = $region37
    $region36: #{classifier_forward.1} parent=1 // pred_region
      %75 = dma.done [#allocation6], 16
    $region37: #{classifier_forward.1} parent=1 // pred_fallthru
      _
    // Predicated region
    $region38: #{classifier_forward.1} parent=1 // pred_check
      _
    $region39: #{classifier_forward.1} parent=1 // pred_check_branch
      %77 = sbr.rel (0) target = $region41
    $region40: #{classifier_forward.1} parent=1 // pred_region
      %78 = dma.done [#allocation6], 128
    $region41: #{classifier_forward.1} parent=1 // pred_fallthru
      _
    // Predicated region
    $region42: #{classifier_forward.1} parent=1 // pred_check
      _
    $region43: #{classifier_forward.1} parent=1 // pred_check_branch
      %80 = sbr.rel (0) target = $region45
    $region44: #{classifier_forward.1} parent=1 // pred_region
      %81 = dma.done [#allocation9], 16
    $region45: #{classifier_forward.1} parent=1 // pred_fallthru
      _
    // Predicated region
    $region46: #{classifier_forward.1} parent=1 // pred_check
      _
    $region47: #{classifier_forward.1} parent=1 // pred_check_branch
      %83 = sbr.rel (0) target = $region49
    $region48: #{classifier_forward.1} parent=1 // pred_region
      %84 = dma.done [#allocation9], 64
    $region49: #{classifier_forward.1} parent=1 // pred_fallthru
      _
    %85 = sfence
    %v86 = vld [vmem:[%s0] sm:$0xff]
    %s87 = scalar_lea.vmem %s0, 8
    %v88 = vld [vmem:[%s87] sm:$0xff]
    %s89 = scalar_lea.vmem %s0, 16
    %v90 = vld [vmem:[%s89] sm:$0xff]
    %s91 = scalar_lea.vmem %s0, 24
    %v92 = vld [vmem:[%s91] sm:$0xff]
    %s93 = scalar_lea.vmem %s0, 32
    %v94 = vld [vmem:[%s93] sm:$0xff]
    %s95 = sld [smem:[#allocation3]]
    %v96 = vstv %s95
    %v97 = vmul.f32 %v86, %v96
    %s98 = sld [smem:[#allocation3 + $0x80]]
    %v99 = vstv %s98
    %v100 = vmul.f32 %v88, %v99
    %v101 = vadd.f32 %v97, %v100
    %s102 = sld [smem:[#allocation3 + $0x100]]
    %v103 = vstv %s102
    %v104 = vmul.f32 %v90, %v103
    %v105 = vadd.f32 %v101, %v104
    %s106 = sld [smem:[#allocation3 + $0x180]]
    %v107 = vstv %s106
    %v108 = vmul.f32 %v92, %v107
    %v109 = vadd.f32 %v105, %v108
    %s110 = sld [smem:[#allocation3 + $0x200]]
    %v111 = vstv %s110
    %v112 = vmul.f32 %v94, %v111
    %v113 = vadd.f32 %v109, %v112
    %s114 = sld [smem:[#allocation5]]
    %v115 = vstv %s114
    %v116 = vadd.f32 %v113, %v115
    %v117 = vmax.f32 %v116, 0.0
    %s118 = sld [smem:[#allocation3 + $0x1]]
    %v119 = vstv %s118
    %v120 = vmul.f32 %v86, %v119
    %s121 = sld [smem:[#allocation3 + $0x81]]
    %v122 = vstv %s121
    %v123 = vmul.f32 %v88, %v122
    %v124 = vadd.f32 %v120, %v123
    %s125 = sld [smem:[#allocation3 + $0x101]]
    %v126 = vstv %s125
    %v127 = vmul.f32 %v90, %v126
    %v128 = vadd.f32 %v124, %v127
    %s129 = sld [smem:[#allocation3 + $0x181]]
    %v130 = vstv %s129
    %v131 = vmul.f32 %v92, %v130
    %v132 = vadd.f32 %v128, %v131
    %s133 = sld [smem:[#allocation3 + $0x201]]
    %v134 = vstv %s133
    %v135 = vmul.f32 %v94, %v134
    %v136 = vadd.f32 %v132, %v135
    %s137 = sld [smem:[#allocation5 + $0x1]]
    %v138 = vstv %s137
    %v139 = vadd.f32 %v136, %v138
    %v140 = vmax.f32 %v139, 0.0
    %s141 = sld [smem:[#allocation3 + $0x2]]
    %v142 = vstv %s141
    %v143 = vmul.f32 %v86, %v142
    %s144 = sld [smem:[#allocation3 + $0x82]]
    %v145 = vstv %s144
    %v146 = vmul.f32 %v88, %v145
    %v147 = vadd.f32 %v143, %v146
    %s148 = sld [smem:[#allocation3 + $0x102]]
    %v149 = vstv %s148
    %v150 = vmul.f32 %v90, %v149
    %v151 = vadd.f32 %v147, %v150
    %s152 = sld [smem:[#allocation3 + $0x182]]
    %v153 = vstv %s152
    %v154 = vmul.f32 %v92, %v153
    %v155 = vadd.f32 %v151, %v154
    %s156 = sld [smem:[#allocation3 + $0x202]]
    %v157 = vstv %s156
    %v158 = vmul.f32 %v94, %v157
    %v159 = vadd.f32 %v155, %v158
    %s160 = sld [smem:[#allocation5 + $0x2]]
    %v161 = vstv %s160
    %v162 = vadd.f32 %v159, %v161
    %v163 = vmax.f32 %v162, 0.0
    %s164 = sld [smem:[#allocation3 + $0x3]]
    %v165 = vstv %s164
    %v166 = vmul.f32 %v86, %v165
    %s167 = sld [smem:[#allocation3 + $0x83]]
    %v168 = vstv %s167
    %v169 = vmul.f32 %v88, %v168
    %v170 = vadd.f32 %v166, %v169
    %s171 = sld [smem:[#allocation3 + $0x103]]
    %v172 = vstv %s171
    %v173 = vmul.f32 %v90, %v172
    %v174 = vadd.f32 %v170, %v173
    %s175 = sld [smem:[#allocation3 + $0x183]]
    %v176 = vstv %s175
    %v177 = vmul.f32 %v92, %v176
    %v178 = vadd.f32 %v174, %v177
    %s179 = sld [smem:[#allocation3 + $0x203]]
    %v180 = vstv %s179
    %v181 = vmul.f32 %v94, %v180
    %v182 = vadd.f32 %v178, %v181
    %s183 = sld [smem:[#allocation5 + $0x3]]
    %v184 = vstv %s183
    %v185 = vadd.f32 %v182, %v184
    %v186 = vmax.f32 %v185, 0.0
    %s187 = sld [smem:[#allocation3 + $0x4]]
    %v188 = vstv %s187
    %v189 = vmul.f32 %v86, %v188
    %s190 = sld [smem:[#allocation3 + $0x84]]
    %v191 = vstv %s190
    %v192 = vmul.f32 %v88, %v191
    %v193 = vadd.f32 %v189, %v192
    %s194 = sld [smem:[#allocation3 + $0x104]]
    %v195 = vstv %s194
    %v196 = vmul.f32 %v90, %v195
    %v197 = vadd.f32 %v193, %v196
    %s198 = sld [smem:[#allocation3 + $0x184]]
    %v199 = vstv %s198
    %v200 = vmul.f32 %v92, %v199
    %v201 = vadd.f32 %v197, %v200
    %s202 = sld [smem:[#allocation3 + $0x204]]
    %v203 = vstv %s202
    %v204 = vmul.f32 %v94, %v203
    %v205 = vadd.f32 %v201, %v204
    %s206 = sld [smem:[#allocation5 + $0x4]]
    %v207 = vstv %s206
    %v208 = vadd.f32 %v205, %v207
    %v209 = vmax.f32 %v208, 0.0
    %s210 = sld [smem:[#allocation7]]
    %v211 = vstv %s210
    %v212 = vmul.f32 %v117, %v211
    %s213 = sld [smem:[#allocation7 + $0x80]]
    %v214 = vstv %s213
    %v215 = vmul.f32 %v140, %v214
    %v216 = vadd.f32 %v212, %v215
    %s217 = sld [smem:[#allocation7 + $0x100]]
    %v218 = vstv %s217
    %v219 = vmul.f32 %v163, %v218
    %v220 = vadd.f32 %v216, %v219
    %s221 = sld [smem:[#allocation7 + $0x180]]
    %v222 = vstv %s221
    %v223 = vmul.f32 %v186, %v222
    %v224 = vadd.f32 %v220, %v223
    %s225 = sld [smem:[#allocation7 + $0x200]]
    %v226 = vstv %s225
    %v227 = vmul.f32 %v209, %v226
    %v228 = vadd.f32 %v224, %v227
    %s229 = sld [smem:[#allocation8]]
    %v230 = vstv %s229
    %v231 = vadd.f32 %v228, %v230
    %v232 = vmax.f32 %v231, 0.0
    %s233 = sld [smem:[#allocation7 + $0x1]]
    %v234 = vstv %s233
    %v235 = vmul.f32 %v117, %v234
    %s236 = sld [smem:[#allocation7 + $0x81]]
    %v237 = vstv %s236
    %v238 = vmul.f32 %v140, %v237
    %v239 = vadd.f32 %v235, %v238
    %s240 = sld [smem:[#allocation7 + $0x101]]
    %v241 = vstv %s240
    %v242 = vmul.f32 %v163, %v241
    %v243 = vadd.f32 %v239, %v242
    %s244 = sld [smem:[#allocation7 + $0x181]]
    %v245 = vstv %s244
    %v246 = vmul.f32 %v186, %v245
    %v247 = vadd.f32 %v243, %v246
    %s248 = sld [smem:[#allocation7 + $0x201]]
    %v249 = vstv %s248
    %v250 = vmul.f32 %v209, %v249
    %v251 = vadd.f32 %v247, %v250
    %s252 = sld [smem:[#allocation8 + $0x1]]
    %v253 = vstv %s252
    %v254 = vadd.f32 %v251, %v253
    %v255 = vmax.f32 %v254, 0.0
    %s256 = sld [smem:[#allocation7 + $0x2]]
    %v257 = vstv %s256
    %v258 = vmul.f32 %v117, %v257
    %s259 = sld [smem:[#allocation7 + $0x82]]
    %v260 = vstv %s259
    %v261 = vmul.f32 %v140, %v260
    %v262 = vadd.f32 %v258, %v261
    %s263 = sld [smem:[#allocation7 + $0x102]]
    %v264 = vstv %s263
    %v265 = vmul.f32 %v163, %v264
    %v266 = vadd.f32 %v262, %v265
    %s267 = sld [smem:[#allocation7 + $0x182]]
    %v268 = vstv %s267
    %v269 = vmul.f32 %v186, %v268
    %v270 = vadd.f32 %v266, %v269
    %s271 = sld [smem:[#allocation7 + $0x202]]
    %v272 = vstv %s271
    %v273 = vmul.f32 %v209, %v272
    %v274 = vadd.f32 %v270, %v273
    %s275 = sld [smem:[#allocation8 + $0x2]]
    %v276 = vstv %s275
    %v277 = vadd.f32 %v274, %v276
    %v278 = vmax.f32 %v277, 0.0
    %s279 = sld [smem:[#allocation10]]
    %v280 = vstv %s279
    %v281 = vmul.f32 %v232, %v280
    %s282 = sld [smem:[#allocation10 + $0x80]]
    %v283 = vstv %s282
    %v284 = vmul.f32 %v255, %v283
    %v285 = vadd.f32 %v281, %v284
    %s286 = sld [smem:[#allocation10 + $0x100]]
    %v287 = vstv %s286
    %v288 = vmul.f32 %v278, %v287
    %v289 = vadd.f32 %v285, %v288
    %s290 = sld [smem:[#allocation2]]
    %v291 = vstv %s290
    %v292 = vadd.f32 %v289, %v291
    %v293 = vxor.u32 %v292, 2147483648
    %v294 = vmul.f32 %v293, 1.442695
    %v295 = vpow.pop %v294
    %v296 = vadd.f32 %v295, 1.0
    %v297 = vrcp.pop %v296
    %v298 = vmul.f32 1.0, %v297
    %299 = vst [vmem:[%s7] sm:$0xff] %v298
    // Predicated region
    $region50: #{classifier_forward.1} parent=1 // pred_check
      _
    $region51: #{classifier_forward.1} parent=1 // pred_check_branch
      %301 = sbr.rel (0) target = $region53
    $region52: #{classifier_forward.1} parent=1 // pred_region
      _
    $region53: #{classifier_forward.1} parent=1 // pred_fallthru
      _
    // Predicated region
    $region54: #{classifier_forward.1} parent=1 // pred_check
      _
    $region55: #{classifier_forward.1} parent=1 // pred_check_branch
      %303 = sbr.rel (0) target = $region57
    $region56: #{classifier_forward.1} parent=1 // pred_region
      _
    $region57: #{classifier_forward.1} parent=1 // pred_fallthru
      _
    %304 = vsyncpa [#allocation4], 1
    %305 = vsyncpa [#allocation6], 1
    %306 = vsyncpa [#allocation9], 1

</llo_original>
